<compile_context>
chip_gen: v7x
topology: tpu7x:2x2x1
jax: 0.10.0
libtpu: 0.0.40
codegen_flags: <defaults>
</compile_context>

<pallas_src>
import functools
import math

import jax
import jax.numpy as jnp
from jax.experimental import pallas as pl
from jax.experimental.pallas import tpu as pltpu

# ----------------------------------------------------------------------------
# Module hyper-parameters (the "args" of SimpleCNN1D), chosen small.
# ----------------------------------------------------------------------------
INPUT_SIZE = (64,)      # args.input_size
OUTPUT_SIZE = (8,)      # args.output_size
N_HIDDEN = 32           # args.n_hidden
N_LAYERS = 2            # args.n_layers (also n_mlp)
CHANNELS = 4            # args.channels
KERNEL = 5              # args.kernel
DILATION = 1            # args.dilation
STRIDE = 2
BN_EPS = 1e-5
BATCH = 2

IN_SIZE = math.prod(INPUT_SIZE)
OUT_SIZE = math.prod(OUTPUT_SIZE)

_HI = jax.lax.Precision.HIGHEST

# ----------------------------------------------------------------------------
# Derive per-layer configuration exactly as SimpleCNN1D.__init__ does.
# ----------------------------------------------------------------------------
conv_cfgs = []
_size = IN_SIZE
for l in range(N_LAYERS):
    dil = (2 ** l) if DILATION == 3 else DILATION
    pad = 3 * (dil + 1)
    in_c = 1 if l == 0 else CHANNELS
    out_c = 1 if l == N_LAYERS - 1 else CHANNELS
    l_out = int((_size + 2 * pad - (dil * (KERNEL - 1) + 1)) / STRIDE + 1)
    conv_cfgs.append(dict(in_c=in_c, out_c=out_c, dil=dil, pad=pad,
                          l_in=_size, l_out=l_out,
                          bn_relu=(l < N_LAYERS - 1)))
    _size = l_out
CNN_SIZE = _size

mlp_cfgs = []
for l in range(N_LAYERS):
    in_f = CNN_SIZE if l == 0 else N_HIDDEN
    out_f = OUT_SIZE if l == N_LAYERS - 1 else N_HIDDEN
    mlp_cfgs.append(dict(in_f=in_f, out_f=out_f, bn_relu=(l < N_LAYERS - 1)))

# ----------------------------------------------------------------------------
# Static fused-layer structure: lower convs to dense matmuls (shapes only here)
# and merge every run of adjacent linear layers that has no ReLU in between
# (conv1 -> fc0 in this config).  All of this is static Python config, so the
# kernel can use static slab offsets.
# ----------------------------------------------------------------------------
_raw_dims = [(c["in_c"] * c["l_in"], c["out_c"] * c["l_out"]) for c in conv_cfgs] \
          + [(c["in_f"], c["out_f"]) for c in mlp_cfgs]
_raw_relu = [c["bn_relu"] for c in conv_cfgs] + [c["bn_relu"] for c in mlp_cfgs]

MERGED_GROUPS = []
_i = 0
while _i < len(_raw_dims):
    _g = [_i]
    while (not _raw_relu[_i]) and _i + 1 < len(_raw_dims):
        _i += 1
        _g.append(_i)
    MERGED_GROUPS.append(tuple(_g))
    _i += 1
MERGED_DIMS = tuple((_raw_dims[g[0]][0], _raw_dims[g[-1]][1]) for g in MERGED_GROUPS)
MERGED_RELU = tuple(_raw_relu[g[-1]] for g in MERGED_GROUPS)
N_FUSED = len(MERGED_DIMS)


def _align(x, a=16):          # bf16 sublane-tile alignment for slab row offsets
    return ((x + a - 1) // a) * a


W_ROW_OFFSETS = []
_off = 0
for (_k, _n) in MERGED_DIMS:
    W_ROW_OFFSETS.append(_off)
    _off += _align(_k, 16)
W_ROW_OFFSETS = tuple(W_ROW_OFFSETS)
W_SLAB_ROWS = _off
W_SLAB_COLS = max(n for (_, n) in MERGED_DIMS)


# ----------------------------------------------------------------------------
# Pallas kernel: the entire fused forward pass, gridless, everything in VMEM.
#   x_ref : (B_pad, IN_SIZE)            f32
#   w_ref : (W_SLAB_ROWS, W_SLAB_COLS)  bf16  -- all folded/merged weights
#   b_ref : (N_FUSED, W_SLAB_COLS)      f32   -- all folded/merged biases
#   o_ref : (B_pad, OUT_SIZE)           f32
# ----------------------------------------------------------------------------
def _fused_forward_kernel(x_ref, w_ref, b_ref, o_ref):
    h = x_ref[...]                                        # f32 activations
    for idx, ((k, n), off, relu) in enumerate(
            zip(MERGED_DIMS, W_ROW_OFFSETS, MERGED_RELU)):
        w = w_ref[off:off + k, 0:n]                       # static slab view, bf16
        # bf16 x bf16 -> single MXU pass, f32 accumulation (explicit choice).
        acc = jnp.dot(h.astype(jnp.bfloat16), w,
                      preferred_element_type=jnp.float32)
        h = acc + b_ref[idx:idx + 1, 0:n]                 # f32 epilogue
        if relu:
            h = jnp.maximum(h, 0.0)
    o_ref[...] = h.astype(o_ref.dtype)


def forward(w_slab, b_slab, x):
    """Single fused Pallas call for the whole SimpleCNN1D forward (eval mode)."""
    x2 = x.reshape(-1, IN_SIZE).astype(jnp.float32)   # == x.view(-1, 1, in_size)
    B = x2.shape[0]
    B_pad = max(8, ((B + 7) // 8) * 8)                # sublane-dense LHS tile
    if B_pad != B:
        x2 = jnp.pad(x2, ((0, B_pad - B), (0, 0)))
    out = pl.pallas_call(
        _fused_forward_kernel,
        out_shape=jax.ShapeDtypeStruct((B_pad, OUT_SIZE), jnp.float32),
        in_specs=[pl.BlockSpec(memory_space=pltpu.MemorySpace.VMEM)] * 3,
        out_specs=pl.BlockSpec(memory_space=pltpu.MemorySpace.VMEM),
    )(x2, w_slab, b_slab)
    return out[:B]


# ----------------------------------------------------------------------------
# Parameter init (deterministic, uniform(-0.01, 0.01) like init_parameters()).
# ----------------------------------------------------------------------------
def init_params(key):
    params = {"conv": [], "mlp": []}
    for cfg in conv_cfgs:
        key, k1, k2 = jax.random.split(key, 3)
        w = jax.random.uniform(k1, (cfg["out_c"], cfg["in_c"], KERNEL),
                               jnp.float32, -0.01, 0.01)
        b = jax.random.uniform(k2, (cfg["out_c"],), jnp.float32, -0.01, 0.01)
        bn = dict(gamma=jnp.ones((cfg["out_c"],), jnp.float32),
                  beta=jnp.zeros((cfg["out_c"],), jnp.float32),
                  mean=jnp.zeros((cfg["out_c"],), jnp.float32),
                  var=jnp.ones((cfg["out_c"],), jnp.float32))
        params["conv"].append((w, b, bn))
    for cfg in mlp_cfgs:
        key, k1, k2 = jax.random.split(key, 3)
        w = jax.random.uniform(k1, (cfg["in_f"], cfg["out_f"]),
                               jnp.float32, -0.01, 0.01)
        b = jax.random.uniform(k2, (cfg["out_f"],), jnp.float32, -0.01, 0.01)
        bn = dict(gamma=jnp.ones((cfg["out_f"],), jnp.float32),
                  beta=jnp.zeros((cfg["out_f"],), jnp.float32),
                  mean=jnp.zeros((cfg["out_f"],), jnp.float32),
                  var=jnp.ones((cfg["out_f"],), jnp.float32))
        params["mlp"].append((w, b, bn))
    return params


def _bn_affine(bn):
    scale = bn["gamma"] * jax.lax.rsqrt(bn["var"] + BN_EPS)
    shift = bn["beta"] - bn["mean"] * scale
    return scale, shift


def conv_to_dense(w, cfg):
    """Lower Conv1d(stride=STRIDE, dilation=dil, zero-pad=pad) to an equivalent
    dense matrix M of shape (C_in*L_in, C_out*L_out) acting on the
    channel-major flattened NCL activation (zero padding folded in)."""
    C_out, C_in, K = w.shape
    L_in, L_out = cfg["l_in"], cfg["l_out"]
    pad, dil = cfg["pad"], cfg["dil"]
    t = jnp.arange(L_out)
    k = jnp.arange(K)
    src = t[:, None] * STRIDE + k[None, :] * dil - pad                       # (L_out, K)
    sel = (src[:, :, None] == jnp.arange(L_in)[None, None, :]).astype(w.dtype)
    dense = jnp.einsum("ock,tkj->cjot", w, sel, precision=_HI)               # (C_in,L_in,C_out,L_out)
    return dense.reshape(C_in * L_in, C_out * L_out)


def prepare_params(params):
    """One-time parameter algebra:
         conv -> dense matmul matrices, BN folded, ReLU-free adjacent linear
         layers merged, everything packed into one bf16 weight slab and one
         f32 bias slab (single DMA each)."""
    # 1) per-layer (W, b) with BN folded
    dense = []
    for cfg, (w, b, bn) in zip(conv_cfgs, params["conv"]):
        W = conv_to_dense(w, cfg)
        bd = jnp.repeat(b, cfg["l_out"])                  # channel-major bias
        if cfg["bn_relu"]:
            scale, shift = _bn_affine(bn)
            sd = jnp.repeat(scale, cfg["l_out"])
            hd = jnp.repeat(shift, cfg["l_out"])
            W = W * sd[None, :]
            bd = bd * sd + hd
        dense.append((W, bd))
    for cfg, (w, b, bn) in zip(mlp_cfgs, params["mlp"]):
        W, bd = w, b
        if cfg["bn_relu"]:
            scale, shift = _bn_affine(bn)
            W = W * scale[None, :]
            bd = bd * scale + shift
        dense.append((W, bd))

    # 2) merge adjacent layers with no nonlinearity in between (conv1 -> fc0)
    merged = []
    for g in MERGED_GROUPS:
        W, bd = dense[g[0]]
        for j in g[1:]:
            W2, b2 = dense[j]
            bd = jnp.dot(bd, W2, precision=_HI) + b2
            W = jnp.dot(W, W2, precision=_HI)
        merged.append((W, bd))

    # 3) pack into slabs (weights -> bf16, biases -> f32)
    w_slab = jnp.zeros((W_SLAB_ROWS, W_SLAB_COLS), jnp.float32)
    b_slab = jnp.zeros((N_FUSED, W_SLAB_COLS), jnp.float32)
    for idx, ((W, bd), off, (k, n)) in enumerate(
            zip(merged, W_ROW_OFFSETS, MERGED_DIMS)):
        assert W.shape == (k, n) and bd.shape == (n,)
        w_slab = w_slab.at[off:off + k, 0:n].set(W)
        b_slab = b_slab.at[idx, 0:n].set(bd)
    return w_slab.astype(jnp.bfloat16), b_slab.astype(jnp.float32)


# ----------------------------------------------------------------------------
# Pure-JAX reference (mirrors the PyTorch graph op-by-op, f32/HIGHEST).
# ----------------------------------------------------------------------------
def reference_forward(params, x):
    B = x.shape[0]
    out = x.reshape(B, 1, IN_SIZE)
    for cfg, (w, b, bn) in zip(conv_cfgs, params["conv"]):
        pad, dil = cfg["pad"], cfg["dil"]
        L_out, C_out, C_in = cfg["l_out"], cfg["out_c"], cfg["in_c"]
        xp = jnp.pad(out, ((0, 0), (0, 0), (pad, pad)))
        idx = jnp.arange(L_out)[:, None] * STRIDE + jnp.arange(KERNEL)[None, :] * dil
        patches = xp[:, :, idx]                                  # (B, C_in, L_out, K)
        patches = jnp.transpose(patches, (0, 2, 1, 3)).reshape(B * L_out, C_in * KERNEL)
        w_mat = w.reshape(C_out, C_in * KERNEL).T
        y = jnp.dot(patches, w_mat, precision=_HI) + b[None, :]
        y = y.reshape(B, L_out, C_out).transpose(0, 2, 1)        # (B, C_out, L_out)
        if cfg["bn_relu"]:
            scale, shift = _bn_affine(bn)
            y = y * scale[None, :, None] + shift[None, :, None]
            y = jnp.maximum(y, 0.0)
        out = y
    out = out.reshape(B, -1)
    for cfg, (w, b, bn) in zip(mlp_cfgs, params["mlp"]):
        out = jnp.dot(out, w, precision=_HI) + b[None, :]
        if cfg["bn_relu"]:
            scale, shift = _bn_affine(bn)
            out = out * scale[None, :] + shift[None, :]
            out = jnp.maximum(out, 0.0)
    return out


if __name__ == "__main__":
    key = jax.random.PRNGKey(0)
    key, kp, kx = jax.random.split(key, 3)
    params = init_params(kp)
    w_slab, b_slab = prepare_params(params)          # one-time parameter prep
    x = jax.random.normal(kx, (BATCH, IN_SIZE), dtype=jnp.float32)

    out = jax.jit(forward)(w_slab, b_slab, x)
    out = jax.block_until_ready(out)
    assert out.shape == (BATCH, OUT_SIZE), out.shape

    ref = reference_forward(params, x)
    max_err = float(jnp.max(jnp.abs(out - ref)))
    # bf16 MXU operands vs f32/HIGHEST reference: expected error ~1e-5 at these
    # magnitudes; tolerance relaxed accordingly (explicit precision choice).
    assert max_err < 5e-4, max_err

    print("KERNEL_OK")
</pallas_src>

<mosaic_0001>
module attributes {stable_mosaic.version = 11 : i64} {
  func.func @_fused_forward_kernel(%arg0: memref<8x64xf32, #tpu.memory_space<vmem>>, %arg1: memref<240x144xbf16, #tpu.memory_space<vmem>>, %arg2: memref<3x144xf32, #tpu.memory_space<vmem>>, %arg3: memref<8x8xf32, #tpu.memory_space<vmem>>) attributes {dimension_semantics = [], scalar_prefetch = 0 : i64, scratch_operands = 0 : i64, tpu.core_type = #tpu.core_type<tc>} {
    %c0 = arith.constant 0 : index
    %c0_0 = arith.constant 0 : index
    %0 = vector.load %arg0[%c0, %c0_0] : memref<8x64xf32, #tpu.memory_space<vmem>>, vector<8x64xf32>
    %c0_1 = arith.constant 0 : index
    %c0_2 = arith.constant 0 : index
    %1 = vector.load %arg1[%c0_1, %c0_2] : memref<240x144xbf16, #tpu.memory_space<vmem>>, vector<64x144xbf16>
    %2 = arith.truncf %0 : vector<8x64xf32> to vector<8x64xbf16>
    %cst = arith.constant dense<0.000000e+00> : vector<8x144xf32>
    %3 = tpu.matmul %2, %1, %cst {dimension_numbers = #tpu.dot_dimension_numbers<[1], [0], [0], [1], [0, 0, 1, 1], [], []>} : vector<8x64xbf16>, vector<64x144xbf16>, vector<8x144xf32> -> vector<8x144xf32>
    %c0_3 = arith.constant 0 : index
    %c0_4 = arith.constant 0 : index
    %4 = vector.load %arg2[%c0_3, %c0_4] : memref<3x144xf32, #tpu.memory_space<vmem>>, vector<1x144xf32>
    %5 = vector.broadcast %4 : vector<1x144xf32> to vector<8x144xf32>
    %6 = arith.addf %3, %5 : vector<8x144xf32>
    %cst_5 = arith.constant 0.000000e+00 : f32
    %7 = vector.broadcast %cst_5 : f32 to vector<8x144xf32>
    %8 = arith.maximumf %6, %7 : vector<8x144xf32>
    %c64 = arith.constant 64 : index
    %c0_6 = arith.constant 0 : index
    %9 = vector.load %arg1[%c64, %c0_6] : memref<240x144xbf16, #tpu.memory_space<vmem>>, vector<144x32xbf16>
    %10 = arith.truncf %8 : vector<8x144xf32> to vector<8x144xbf16>
    %cst_7 = arith.constant dense<0.000000e+00> : vector<8x32xf32>
    %11 = tpu.matmul %10, %9, %cst_7 {dimension_numbers = #tpu.dot_dimension_numbers<[1], [0], [0], [1], [0, 0, 1, 1], [], []>} : vector<8x144xbf16>, vector<144x32xbf16>, vector<8x32xf32> -> vector<8x32xf32>
    %c1 = arith.constant 1 : index
    %c0_8 = arith.constant 0 : index
    %12 = vector.load %arg2[%c1, %c0_8] : memref<3x144xf32, #tpu.memory_space<vmem>>, vector<1x32xf32>
    %13 = vector.broadcast %12 : vector<1x32xf32> to vector<8x32xf32>
    %14 = arith.addf %11, %13 : vector<8x32xf32>
    %cst_9 = arith.constant 0.000000e+00 : f32
    %15 = vector.broadcast %cst_9 : f32 to vector<8x32xf32>
    %16 = arith.maximumf %14, %15 : vector<8x32xf32>
    %c208 = arith.constant 208 : index
    %c0_10 = arith.constant 0 : index
    %17 = vector.load %arg1[%c208, %c0_10] : memref<240x144xbf16, #tpu.memory_space<vmem>>, vector<32x8xbf16>
    %18 = arith.truncf %16 : vector<8x32xf32> to vector<8x32xbf16>
    %cst_11 = arith.constant dense<0.000000e+00> : vector<8x8xf32>
    %19 = tpu.matmul %18, %17, %cst_11 {dimension_numbers = #tpu.dot_dimension_numbers<[1], [0], [0], [1], [0, 0, 1, 1], [], []>} : vector<8x32xbf16>, vector<32x8xbf16>, vector<8x8xf32> -> vector<8x8xf32>
    %c2 = arith.constant 2 : index
    %c0_12 = arith.constant 0 : index
    %20 = vector.load %arg2[%c2, %c0_12] : memref<3x144xf32, #tpu.memory_space<vmem>>, vector<1x8xf32>
    %21 = vector.broadcast %20 : vector<1x8xf32> to vector<8x8xf32>
    %22 = arith.addf %19, %21 : vector<8x8xf32>
    %c0_13 = arith.constant 0 : index
    %c0_14 = arith.constant 0 : index
    %23 = vector.load %arg3[%c0_13, %c0_14] : memref<8x8xf32, #tpu.memory_space<vmem>>, vector<8x8xf32>
    tpu.vector_store %arg3[%c0_13, %c0_14], %22 {strides = array<i32>} : memref<8x8xf32, #tpu.memory_space<vmem>>, vector<8x8xf32>,
    return
  }
}

</mosaic_0001>

<llo_original>
// kernel: forward.1
$region0: #{forward.1}
  #allocation0 [shape = 'u32[]', space=smem, size = 0x4, offset = 0x4, fixed_abs, tag = 'smem constant byte address 0x4 - core index']
  #allocation1 [shape = 'u32[144,128]{1,0:T(1,128)}', space=vmem, size = 0x12000, scoped, tag = 'internal scratch']
  %s0 = inlined_call_operand.vmem [shape: f32[8,64], index: 0, kind: input, shape index: {}]
  %s1 = inlined_call_operand.vmem [shape: bf16[240,144], index: 1, kind: input, shape index: {}]
  %s2 = inlined_call_operand.vmem [shape: f32[3,144], index: 2, kind: input, shape index: {}]
  %s3 = inlined_call_operand.vmem [shape: f32[8,8], index: 3, kind: output, shape index: {}]
  %s4 = sld [smem:[#allocation0]]
  $region22: #{forward.1} parent=0
    _
  %s6 = ssub.s32 1, %s4
  %s7 = scalar_select 0, %s6, %s4
  // Predicated region
  $region2: #{forward.1} parent=0 // pred_check
    _
  $region3: #{forward.1} parent=0 // pred_check_branch
    %9 = sbr.rel (0) target = $region5
  $region4: #{forward.1} parent=0 // pred_region
    _
  $region5: #{forward.1} parent=0 // pred_fallthru
    _
  // Predicated region
  $region6: #{forward.1} parent=0 // pred_check
    _
  $region7: #{forward.1} parent=0 // pred_check_branch
    %11 = sbr.rel (0) target = $region9
  $region8: #{forward.1} parent=0 // pred_region
    _
  $region9: #{forward.1} parent=0 // pred_fallthru
    _
  // Predicated region
  $region10: #{forward.1} parent=0 // pred_check
    _
  $region11: #{forward.1} parent=0 // pred_check_branch
    %13 = sbr.rel (0) target = $region13
  $region12: #{forward.1} parent=0 // pred_region
    _
  $region13: #{forward.1} parent=0 // pred_fallthru
    _
  %v15 = vld [vmem:[%s0] sm:$0xff]
  %v16 = vld [vmem:[%s1] sm:$0xff]
  %v17 = vld [vmem:[%s1 + $0x8] sm:$0xff]
  %v18 = vld [vmem:[%s1 + $0x10] sm:$0xff]
  %v19 = vld [vmem:[%s1 + $0x18] sm:$0xff]
  %v20 = vld [vmem:[%s1 + $0x20] sm:$0xff]
  %v21 = vld [vmem:[%s1 + $0x28] sm:$0xff]
  %v22 = vld [vmem:[%s1 + $0x30] sm:$0xff]
  %v23 = vld [vmem:[%s1 + $0x38] sm:$0xff]
  %v24 = vpack.c.bf16 %v15, %v15
  %v25 = vld [vmem:[%s2] ss:$4 sm:$0x3]
  %v27 = vlaneseq
  %v28 = vshrl.u32 %v27, 7
  %v29 = vsub.s32 0, %v28
  %v30 = vrot.slane %v25, %v29
  %v31 = vlaneseq
  %v32 = vshrl.u32 %v31, 7
  %v33 = vsub.s32 1, %v32
  %v34 = vrot.slane %v25, %v33
  %v45 = vunpack.c.l.b16 %v16
  %v46 = vunpack.c.h.b16 %v16
  %v47 = vunpack.c.l.b16 %v17
  %v48 = vunpack.c.h.b16 %v17
  %v49 = vunpack.c.l.b16 %v18
  %v50 = vunpack.c.h.b16 %v18
  %v51 = vunpack.c.l.b16 %v19
  %v52 = vunpack.c.h.b16 %v19
  %v53 = vunpack.c.l.b16 %v20
  %v54 = vunpack.c.h.b16 %v20
  %v55 = vunpack.c.l.b16 %v21
  %v56 = vunpack.c.h.b16 %v21
  %v57 = vunpack.c.l.b16 %v22
  %v58 = vunpack.c.h.b16 %v22
  %v59 = vunpack.c.l.b16 %v23
  %v60 = vunpack.c.h.b16 %v23
  %v61 = vpack.c.b16 %v47, %v45
  %v62 = vpack.c.b16 %v48, %v46
  %v63 = vpack.c.b16 %v51, %v49
  %v64 = vpack.c.b16 %v52, %v50
  %v65 = vpack.c.b16 %v55, %v53
  %v66 = vpack.c.b16 %v56, %v54
  %v67 = vpack.c.b16 %v59, %v57
  %v68 = vpack.c.b16 %v60, %v58
  %vm77 = vcmask 523264
  %v79 = vsel %vm77, %v24, 0
  %81 = vmatprep.subr.bf16.mxu0 %v62
  %82 = vmatpush1.bf16.msra.mxu0 %v61
  %83 = vmatprep.subr.bf16.mxu0 %v64
  %84 = vmatpush1.bf16.msra.mxu0 %v63
  %85 = vmatprep.subr.bf16.mxu0 %v66
  %86 = vmatpush1.bf16.msra.mxu0 %v65
  %87 = vmatprep.subr.bf16.mxu0 %v68
  %88 = vmatpush1.bf16.msra.mxu0 %v67
  %89 = vmatprep.subr.bf16.mxu0 0
  %90 = vmatpush1.bf16.msra.mxu0 0
  %91 = vmatprep.subr.bf16.mxu0 0
  %92 = vmatpush1.bf16.msra.mxu0 0
  %93 = vmatprep.subr.bf16.mxu0 0
  %94 = vmatpush1.bf16.msra.mxu0 0
  %95 = vmatprep.subr.bf16.mxu0 0
  %96 = vmatpush1.bf16.msra.mxu0 0
  %97 = vmatprep.subr.bf16.mxu0 0
  %98 = vmatpush1.bf16.msra.mxu0 0
  %99 = vmatprep.subr.bf16.mxu0 0
  %100 = vmatpush1.bf16.msra.mxu0 0
  %101 = vmatprep.subr.bf16.mxu0 0
  %102 = vmatpush1.bf16.msra.mxu0 0
  %103 = vmatprep.subr.bf16.mxu0 0
  %104 = vmatpush1.bf16.msra.mxu0 0
  %105 = vmatprep.subr.bf16.mxu0 0
  %106 = vmatpush1.bf16.msra.mxu0 0
  %107 = vmatprep.subr.bf16.mxu0 0
  %108 = vmatpush1.bf16.msra.mxu0 0
  %109 = vmatprep.subr.bf16.mxu0 0
  %110 = vmatpush1.bf16.msra.mxu0 0
  %111 = vmatprep.subr.bf16.mxu0 0
  %112 = vmatpush1.bf16.msra.mxu0 0
  %113 = vmatprep.mubr.bf16.mxu0 0
  %114 = vmatmul.mubr.bf16.gmra.mrb[0].mxu0 %v79
  %v115 = vpop.f32.mrb[0].mxu0
  %v116 = vadd.f32 %v30, %v115
  %v117 = vpop.f32.mrb[0].mxu0
  %v118 = vadd.f32 %v34, %v117
  %v119 = vpop.f32.mrb[0].mxu0
  %v120 = vpop.f32.mrb[0].mxu0
  %121 = vdwg.mxu0
  %v122 = vmax.f32 %v116, 0.0
  %v123 = vmax.f32 %v118, 0.0
  %v124 = vld [vmem:[%s1 + $0x40] sm:$0xf]
  %v125 = vld [vmem:[%s1 + $0x48] sm:$0xf]
  %v126 = vld [vmem:[%s1 + $0x50] sm:$0xf]
  %v127 = vld [vmem:[%s1 + $0x58] sm:$0xf]
  %v128 = vld [vmem:[%s1 + $0x60] sm:$0xf]
  %v129 = vld [vmem:[%s1 + $0x68] sm:$0xf]
  %v130 = vld [vmem:[%s1 + $0x70] sm:$0xf]
  %v131 = vld [vmem:[%s1 + $0x78] sm:$0xf]
  %v132 = vld [vmem:[%s1 + $0x80] sm:$0xf]
  %v133 = vld [vmem:[%s1 + $0x88] sm:$0xf]
  %v134 = vld [vmem:[%s1 + $0x90] sm:$0xf]
  %v135 = vld [vmem:[%s1 + $0x98] sm:$0xf]
  %v136 = vld [vmem:[%s1 + $0xa0] sm:$0xf]
  %v137 = vld [vmem:[%s1 + $0xa8] sm:$0xf]
  %v138 = vld [vmem:[%s1 + $0xb0] sm:$0xf]
  %v139 = vld [vmem:[%s1 + $0xb8] sm:$0xf]
  %v140 = vld [vmem:[%s1 + $0xc0] sm:$0xf]
  %v141 = vld [vmem:[%s1 + $0xc8] sm:$0xf]
  %v142 = vpack.c.bf16 %v122, %v122
  %v143 = vpack.c.bf16 %v123, %v123
  %v144 = vld [vmem:[%s2 + $0x1] sm:$0x1]
  %v145 = vlaneseq
  %v146 = vshrl.u32 %v145, 7
  %v147 = vsub.s32 0, %v146
  %v148 = vrot.slane %v144, %v147
  %v167 = vunpack.c.l.b16 %v124
  %v168 = vunpack.c.l.b16 %v125
  %v169 = vunpack.c.l.b16 %v126
  %v170 = vunpack.c.l.b16 %v127
  %v171 = vunpack.c.l.b16 %v128
  %v172 = vunpack.c.l.b16 %v129
  %v173 = vunpack.c.l.b16 %v130
  %v174 = vunpack.c.l.b16 %v131
  %v175 = vunpack.c.l.b16 %v132
  %v176 = vunpack.c.l.b16 %v133
  %v177 = vunpack.c.l.b16 %v134
  %v178 = vunpack.c.l.b16 %v135
  %v179 = vunpack.c.l.b16 %v136
  %v180 = vunpack.c.l.b16 %v137
  %v181 = vunpack.c.l.b16 %v138
  %v182 = vunpack.c.l.b16 %v139
  %v183 = vunpack.c.l.b16 %v140
  %v184 = vunpack.c.l.b16 %v141
  %v185 = vpack.c.b16 %v168, %v167
  %v186 = vpack.c.b16 %v170, %v169
  %v187 = vpack.c.b16 %v172, %v171
  %v188 = vpack.c.b16 %v174, %v173
  %v189 = vpack.c.b16 %v176, %v175
  %v190 = vpack.c.b16 %v178, %v177
  %v191 = vpack.c.b16 %v180, %v179
  %v192 = vpack.c.b16 %v182, %v181
  %v193 = vpack.c.b16 %v184, %v183
  %vm203 = vcmask 130048
  %v205 = vsel %vm203, %v143, 0
  %207 = vmatprep.subr.bf16.mxu0 0
  %208 = vmatpush1.bf16.msra.mxu0 %v185
  %209 = vmatprep.subr.bf16.mxu0 0
  %210 = vmatpush1.bf16.msra.mxu0 %v186
  %211 = vmatprep.subr.bf16.mxu0 0
  %212 = vmatpush1.bf16.msra.mxu0 %v187
  %213 = vmatprep.subr.bf16.mxu0 0
  %214 = vmatpush1.bf16.msra.mxu0 %v188
  %215 = vmatprep.subr.bf16.mxu0 0
  %216 = vmatpush1.bf16.msra.mxu0 %v189
  %217 = vmatprep.subr.bf16.mxu0 0
  %218 = vmatpush1.bf16.msra.mxu0 %v190
  %219 = vmatprep.subr.bf16.mxu0 0
  %220 = vmatpush1.bf16.msra.mxu0 %v191
  %221 = vmatprep.subr.bf16.mxu0 0
  %222 = vmatpush1.bf16.msra.mxu0 %v192
  %223 = vmatprep.subr.bf16.mxu0 0
  %224 = vmatpush1.bf16.msra.mxu0 %v193
  %225 = vmatprep.subr.bf16.mxu0 0
  %226 = vmatpush1.bf16.msra.mxu0 0
  %227 = vmatprep.subr.bf16.mxu0 0
  %228 = vmatpush1.bf16.msra.mxu0 0
  %229 = vmatprep.subr.bf16.mxu0 0
  %230 = vmatpush1.bf16.msra.mxu0 0
  %231 = vmatprep.subr.bf16.mxu0 0
  %232 = vmatpush1.bf16.msra.mxu0 0
  %233 = vmatprep.subr.bf16.mxu0 0
  %234 = vmatpush1.bf16.msra.mxu0 0
  %235 = vmatprep.subr.bf16.mxu0 0
  %236 = vmatpush1.bf16.msra.mxu0 0
  %237 = vmatprep.subr.bf16.mxu0 0
  %238 = vmatpush1.bf16.msra.mxu0 0
  %239 = vmatprep.mubr.bf16.mxu0 %v205
  %240 = vmatmul.mubr.bf16.gmra.mrb[0].mxu0 %v142
  %v241 = vpop.f32.mrb[0].mxu0
  %v242 = vadd.f32 %v148, %v241
  %v243 = vpop.f32.mrb[0].mxu0
  %v244 = vpop.f32.mrb[0].mxu0
  %v245 = vpop.f32.mrb[0].mxu0
  %246 = vdwg.mxu0
  %v247 = vmax.f32 %v242, 0.0
  %v248 = vld [vmem:[%s1 + $0xd0] sm:$0xf]
  %v249 = vld [vmem:[%s1 + $0xd8] sm:$0xf]
  %v250 = vld [vmem:[%s1 + $0xe0] sm:$0xf]
  %v251 = vld [vmem:[%s1 + $0xe8] sm:$0xf]
  %v252 = vpack.c.bf16 %v247, %v247
  %v253 = vld [vmem:[%s2 + $0x2] sm:$0x1]
  %v254 = vlaneseq
  %v255 = vshrl.u32 %v254, 7
  %v256 = vsub.s32 0, %v255
  %v257 = vrot.slane %v253, %v256
  %v262 = vunpack.c.l.b16 %v248
  %v263 = vunpack.c.l.b16 %v249
  %v264 = vunpack.c.l.b16 %v250
  %v265 = vunpack.c.l.b16 %v251
  %v266 = vpack.c.b16 %v263, %v262
  %v267 = vpack.c.b16 %v265, %v264
  %vm270 = vcmask 261120
  %v272 = vsel %vm270, %v252, 0
  %274 = vmatprep.subr.bf16.mxu0 0
  %275 = vmatpush1.bf16.msra.mxu0 %v266
  %276 = vmatprep.subr.bf16.mxu0 0
  %277 = vmatpush1.bf16.msra.mxu0 %v267
  %278 = vmatprep.subr.bf16.mxu0 0
  %279 = vmatpush1.bf16.msra.mxu0 0
  %280 = vmatprep.subr.bf16.mxu0 0
  %281 = vmatpush1.bf16.msra.mxu0 0
  %282 = vmatprep.subr.bf16.mxu0 0
  %283 = vmatpush1.bf16.msra.mxu0 0
  %284 = vmatprep.subr.bf16.mxu0 0
  %285 = vmatpush1.bf16.msra.mxu0 0
  %286 = vmatprep.subr.bf16.mxu0 0
  %287 = vmatpush1.bf16.msra.mxu0 0
  %288 = vmatprep.subr.bf16.mxu0 0
  %289 = vmatpush1.bf16.msra.mxu0 0
  %290 = vmatprep.subr.bf16.mxu0 0
  %291 = vmatpush1.bf16.msra.mxu0 0
  %292 = vmatprep.subr.bf16.mxu0 0
  %293 = vmatpush1.bf16.msra.mxu0 0
  %294 = vmatprep.subr.bf16.mxu0 0
  %295 = vmatpush1.bf16.msra.mxu0 0
  %296 = vmatprep.subr.bf16.mxu0 0
  %297 = vmatpush1.bf16.msra.mxu0 0
  %298 = vmatprep.subr.bf16.mxu0 0
  %299 = vmatpush1.bf16.msra.mxu0 0
  %300 = vmatprep.subr.bf16.mxu0 0
  %301 = vmatpush1.bf16.msra.mxu0 0
  %302 = vmatprep.subr.bf16.mxu0 0
  %303 = vmatpush1.bf16.msra.mxu0 0
  %304 = vmatprep.subr.bf16.mxu0 0
  %305 = vmatpush1.bf16.msra.mxu0 0
  %306 = vmatprep.mubr.bf16.mxu0 0
  %307 = vmatmul.mubr.bf16.gmra.mrb[0].mxu0 %v272
  %v308 = vpop.f32.mrb[0].mxu0
  %v309 = vadd.f32 %v257, %v308
  %v310 = vpop.f32.mrb[0].mxu0
  %v311 = vpop.f32.mrb[0].mxu0
  %v312 = vpop.f32.mrb[0].mxu0
  %313 = vdwg.mxu0
  %vm314 = vcmask 64512
  %315 = vst.msk [vmem:[%s3] sm:$0xff] %vm314, %v309
  // Predicated region
  $region14: #{forward.1} parent=0 // pred_check
    _
  $region15: #{forward.1} parent=0 // pred_check_branch
    %317 = sbr.rel (0) target = $region17
  $region16: #{forward.1} parent=0 // pred_region
    _
  $region17: #{forward.1} parent=0 // pred_fallthru
    _
  // Predicated region
  $region18: #{forward.1} parent=0 // pred_check
    _
  $region19: #{forward.1} parent=0 // pred_check_branch
    %319 = sbr.rel (0) target = $region21
  $region20: #{forward.1} parent=0 // pred_region
    _
  $region21: #{forward.1} parent=0 // pred_fallthru
    _

</llo_original>
